<compile_context>
chip_gen: v7x
topology: tpu7x:2x2x1
jax: 0.10.0
libtpu: 0.0.40
codegen_flags: <defaults>
</compile_context>

<pallas_src>
import functools

import jax
import jax.numpy as jnp
import numpy as np
from jax.experimental import pallas as pl
from jax.experimental.pallas import tpu as pltpu


def _round_up(x, m):
    return ((x + m - 1) // m) * m


def _padded_tile_bytes(rows, cols, itemsize):
    """VMEM footprint of a (rows, cols) f32/bf16 tile after (sublane, lane) padding."""
    sub_mult = 8 * max(1, 4 // max(itemsize, 1))      # f32 -> 8, bf16 -> 16
    return _round_up(max(rows, 1), sub_mult) * _round_up(max(cols, 1), 128) * itemsize


def _flat_place(v, off, length):
    """Embed v (ct, Lv) into a zero (ct, length) row at lane offset `off` (static)."""
    ct, lv = v.shape
    take = min(lv, length - off)
    parts = []
    if off > 0:
        parts.append(jnp.zeros((ct, off), v.dtype))
    parts.append(v if take == lv else v[:, :take])
    tail = length - off - take
    if tail > 0:
        parts.append(jnp.zeros((ct, tail), v.dtype))
    return parts[0] if len(parts) == 1 else jnp.concatenate(parts, axis=1)


def _flat_window(v, off, length):
    """v[:, off:off+length], zero-padded at the end if it runs past v's width (static)."""
    ct, lv = v.shape
    take = min(length, lv - off)
    out = v[:, off:off + take]
    if take == length:
        return out
    return jnp.concatenate([out, jnp.zeros((ct, length - take), v.dtype)], axis=1)


# ---------------------------------------------------------------------------
# Fused kernel: tap-GEMM (MXU) + stride-2 phase combine + bias (+ fused blur).
# Flat coordinates: input / tap planes have row stride Wp=W+1 (last column is a zero pad),
# phase canvases have row stride Wp as well, so a tap (ki,kj) is a constant lane shift of
# (ki//2)*Wp + (kj//2) and the AvgPool2d(2,1) shifts are also constant lane offsets.
# ---------------------------------------------------------------------------
def _make_upblock_kernel(h, w, ct, add_blur):
    wp = w + 1
    hp = h + 1
    s_in = h * wp              # flat length of one (padded) input / tap plane
    s_canvas = hp * wp         # flat length of one phase canvas

    def taps_for_phase(pi, pj):
        kis = (0, 2) if pi == 0 else (1,)
        kjs = (0, 2) if pj == 0 else (1,)
        return [(3 * ki + kj, (ki // 2) * wp + (kj // 2)) for ki in kis for kj in kjs]

    def kernel(x_ref, w_ref, b_ref, o_ref):
        x = x_ref[0]                                     # (Cin, s_in), spatial on lanes
        wmat = w_ref[0]                                  # (9*ct, Cin), tap-major rows
        # All 9 ConvTranspose taps for this Cout tile in one MXU GEMM (f32 accumulation).
        y = jnp.dot(wmat, x, preferred_element_type=jnp.float32)   # (9*ct, s_in)
        bias = b_ref[0].astype(jnp.float32)              # (ct, 1) -> broadcasts over lanes

        # Build each stride-2 output phase as a LOCAL value: shifted taps + bias, one store each.
        canvases = {}
        for pi in range(2):
            for pj in range(2):
                placed = [_flat_place(y[t * ct:(t + 1) * ct, :], off, s_canvas)
                          for (t, off) in taps_for_phase(pi, pj)]
                acc = placed[0]
                for p in placed[1:]:
                    acc = acc + p
                canvases[(pi, pj)] = acc + bias

        if not add_blur:
            for pi in range(2):
                for pj in range(2):
                    o_ref[0, 2 * pi + pj] = canvases[(pi, pj)]
        else:
            # AvgPool2d(2, stride=1) evaluated in phase space (fused, no HBM round trip).
            for pa in range(2):
                for pb in range(2):
                    t1 = _flat_window(canvases[(pa, pb)], 0, s_in)
                    t2 = _flat_window(canvases[(1 - pa, pb)], pa * wp, s_in)
                    t3 = _flat_window(canvases[(pa, 1 - pb)], pb, s_in)
                    t4 = _flat_window(canvases[(1 - pa, 1 - pb)], pa * wp + pb, s_in)
                    o_ref[0, 2 * pa + pb] = 0.25 * (t1 + t2 + t3 + t4)

    return kernel


def _plan_tiles(n, cin, cout_pad, s_in, s_canvas, s_out, in_itemsize, vmem_budget=48 << 20):
    """Pick a Cout tile (multiple of 8, divides cout_pad) that fits the VMEM budget and,
    when N == 1, gives >= 2 grid steps so both v7x TensorCores get work."""
    candidates = [d for d in range(min(cout_pad, 64), 7, -8) if cout_pad % d == 0]
    if not candidates:
        candidates = [cout_pad]
    if n == 1:
        multi = [d for d in candidates if cout_pad // d >= 2]
        candidates = multi + [d for d in candidates if d not in multi]

    def estimate(ct):
        blocks = 2 * (_padded_tile_bytes(cin, s_in, in_itemsize)          # x (double buffered)
                      + _padded_tile_bytes(9 * ct, cin, in_itemsize)      # weights
                      + _padded_tile_bytes(ct, 1, 4)                      # bias
                      + _padded_tile_bytes(4 * ct, s_out, 4))             # output block
        inter = (_padded_tile_bytes(9 * ct, s_in, 4)                      # tap GEMM result
                 + 8 * _padded_tile_bytes(ct, s_canvas, 4))               # canvases + temps
        return blocks + 2 * inter + (2 << 20)

    ct = candidates[-1]
    for cand in candidates:
        if estimate(cand) <= vmem_budget:
            ct = cand
            break
    vmem_limit = int(min(56 << 20, max(24 << 20, estimate(ct))))
    return ct, vmem_limit


def up_block_forward(x_nchw, weight, bias, *, stride=2, add_blur=False, mxu_dtype=None):
    """UpBlock forward.  weight: (in_f, out_f, 3, 3) as in torch.nn.ConvTranspose2d."""
    if stride != 2:
        # TODO(synk): general-stride path (the stride-2 phase decomposition below is specific).
        raise NotImplementedError("Pallas UpBlock supports stride=2 (the module default)")
    n, cin, h, w = x_nchw.shape
    assert weight.shape[0] == cin and tuple(weight.shape[2:]) == (3, 3)
    cout = weight.shape[1]
    hp, wp = h + 1, w + 1
    s_in = h * wp
    s_canvas = hp * wp
    s_out = s_in if add_blur else s_canvas

    cout_pad = _round_up(cout, 8)
    in_dtype = jnp.dtype(mxu_dtype) if mxu_dtype is not None else jnp.dtype(jnp.float32)
    # TODO(synk): add an H-tile grid axis (1-row halo via manual DMA) for very large images;
    #             the Cout tile alone bounds per-step VMEM only up to moderate H*W.
    ct, vmem_limit = _plan_tiles(n, cin, cout_pad, s_in, s_canvas, s_out, in_dtype.itemsize)
    c_tiles = cout_pad // ct

    # --- operands (all prep is input-sized / weight-sized; no output-sized HBM passes) ------
    # Input: append one zero column per row, flatten -> lane-dense flat rows, still NCHW order.
    xf = jnp.pad(x_nchw, ((0, 0), (0, 0), (0, 0), (0, 1))).reshape(n, cin, s_in)
    # Weights: (Cin, Cout, 3, 3) -> per-Cout-tile (9*ct, Cin), rows ordered tap-major.
    w9t = jnp.transpose(weight, (2, 3, 1, 0)).reshape(9, cout, cin)
    if cout_pad != cout:
        w9t = jnp.pad(w9t, ((0, 0), (0, cout_pad - cout), (0, 0)))
    w9t = w9t.reshape(9, c_tiles, ct, cin).transpose(1, 0, 2, 3).reshape(c_tiles, 9 * ct, cin)
    b = bias.astype(jnp.float32)
    if cout_pad != cout:
        b = jnp.pad(b, (0, cout_pad - cout))
    b = b.reshape(c_tiles, ct, 1)
    if mxu_dtype is not None:        # e.g. jnp.bfloat16 on v6e/v7x (GEMM still accumulates f32)
        xf = xf.astype(mxu_dtype)
        w9t = w9t.astype(mxu_dtype)

    kernel = _make_upblock_kernel(h, w, ct, add_blur)
    elt = jnp.dtype(xf.dtype).itemsize
    out_bytes = n * 4 * cout_pad * s_out * 4
    cost = pl.CostEstimate(
        flops=2 * n * (9 * cout_pad) * cin * s_in + 8 * n * cout_pad * s_canvas,
        transcendentals=0,
        bytes_accessed=xf.size * elt + n * w9t.size * elt + b.size * 4 + out_bytes)

    phases = pl.pallas_call(
        kernel,
        out_shape=jax.ShapeDtypeStruct((n, 4, cout_pad, s_out), jnp.float32),
        grid=(n, c_tiles),
        in_specs=[
            pl.BlockSpec((1, cin, s_in), lambda b_, c_: (b_, 0, 0)),
            pl.BlockSpec((1, 9 * ct, cin), lambda b_, c_: (c_, 0, 0)),
            pl.BlockSpec((1, ct, 1), lambda b_, c_: (c_, 0, 0)),
        ],
        out_specs=pl.BlockSpec((1, 4, ct, s_out), lambda b_, c_: (b_, 0, c_, 0)),
        compiler_params=pltpu.CompilerParams(
            dimension_semantics=("parallel", "parallel"),
            vmem_limit_bytes=vmem_limit),
        cost_estimate=cost,
    )(xf, w9t, b)

    # --- interleave the 4 stride-2 phases into NCHW (one transpose/slice pass) --------------
    # TODO(synk): emit the interleaved NCHW slab directly from the kernel (strided sublane/lane
    #             stores) to drop this last output-sized XLA pass.
    ph_h = h if add_blur else hp
    ho, wo = 2 * h + 1, 2 * w + 1
    out_h, out_w = (ho - 1, wo - 1) if add_blur else (ho, wo)
    y = phases.reshape(n, 2, 2, cout_pad, ph_h, wp)
    y = jnp.transpose(y, (0, 3, 4, 1, 5, 2))          # (n, Cout, ph_h, 2, wp, 2)
    y = y.reshape(n, cout_pad, 2 * ph_h, 2 * wp)      # row/col interleave = free dim merge
    return y[:, :cout, :out_h, :out_w]


def reference_forward(x_nchw, weight, bias, *, stride=2, add_blur=False):
    """Pure-JAX reference mirroring torch ConvTranspose2d/AvgPool2d semantics (NCHW)."""
    n, cin, h, w = x_nchw.shape
    cout = weight.shape[1]
    kh = kw = 3
    ho = (h - 1) * stride + kh
    wo = (w - 1) * stride + kw
    y = jnp.zeros((n, cout, ho, wo), jnp.float32)
    for i in range(kh):
        for j in range(kw):
            contrib = jnp.einsum("nihw,io->nohw", x_nchw, weight[:, :, i, j])
            y = y.at[:, :, i:i + (h - 1) * stride + 1:stride,
                           j:j + (w - 1) * stride + 1:stride].add(contrib)
    y = y + bias[None, :, None, None]
    if add_blur:
        y = 0.25 * (y[:, :, :-1, :-1] + y[:, :, 1:, :-1]
                    + y[:, :, :-1, 1:] + y[:, :, 1:, 1:])
    return y


if __name__ == "__main__":
    in_f, out_f = 4, 8
    n, h, w = 2, 16, 16

    key = jax.random.PRNGKey(0)
    kx, kw_, kb = jax.random.split(key, 3)
    x = jax.random.normal(kx, (n, in_f, h, w), jnp.float32)
    weight = jax.random.normal(kw_, (in_f, out_f, 3, 3), jnp.float32) * 0.1
    bias = jax.random.normal(kb, (out_f,), jnp.float32) * 0.1

    fwd_blur = jax.jit(functools.partial(up_block_forward, add_blur=True))
    fwd_plain = jax.jit(functools.partial(up_block_forward, add_blur=False))

    # add_blur=True exercises the GEMM + blur-fused phase combine.
    out = jax.block_until_ready(fwd_blur(x, weight, bias))
    ref = reference_forward(x, weight, bias, add_blur=True)
    np.testing.assert_allclose(np.asarray(out), np.asarray(ref), rtol=1e-4, atol=1e-4)
    assert out.shape == (n, out_f, 2 * h, 2 * w)

    # add_blur=False exercises the plain (ConvTranspose-only) path.
    out2 = jax.block_until_ready(fwd_plain(x, weight, bias))
    ref2 = reference_forward(x, weight, bias, add_blur=False)
    np.testing.assert_allclose(np.asarray(out2), np.asarray(ref2), rtol=1e-4, atol=1e-4)
    assert out2.shape == (n, out_f, 2 * h + 1, 2 * w + 1)

    print("KERNEL_OK")
</pallas_src>

<mosaic_0001>
module attributes {stable_mosaic.version = 11 : i64} {
  func.func @kernel(%arg0: i32, %arg1: i32, %arg2: memref<1x4x272xf32, #tpu.memory_space<vmem>>, %arg3: memref<1x72x4xf32, #tpu.memory_space<vmem>>, %arg4: memref<1x8x1xf32, #tpu.memory_space<vmem>>, %arg5: memref<1x4x8x272xf32, #tpu.memory_space<vmem>>) attributes {dimension_semantics = [#tpu.dimension_semantics<parallel>, #tpu.dimension_semantics<parallel>], iteration_bounds = array<i64: 2, 1>, scalar_prefetch = 0 : i64, scratch_operands = 0 : i64, tpu.core_type = #tpu.core_type<tc>, window_params = [{transform_indices = @transform_0, window_bounds = array<i64: 1, 4, 272>}, {transform_indices = @transform_1, window_bounds = array<i64: 1, 72, 4>}, {transform_indices = @transform_2, window_bounds = array<i64: 1, 8, 1>}, {transform_indices = @transform_3, window_bounds = array<i64: 1, 4, 8, 272>}]} {
    %c0 = arith.constant 0 : index
    %c0_0 = arith.constant 0 : index
    %c0_1 = arith.constant 0 : index
    %0 = vector.load %arg2[%c0, %c0_0, %c0_1] : memref<1x4x272xf32, #tpu.memory_space<vmem>>, vector<1x4x272xf32>
    %1 = vector.shape_cast %0 : vector<1x4x272xf32> to vector<4x272xf32>
    %c0_2 = arith.constant 0 : index
    %c0_3 = arith.constant 0 : index
    %c0_4 = arith.constant 0 : index
    %2 = vector.load %arg3[%c0_2, %c0_3, %c0_4] : memref<1x72x4xf32, #tpu.memory_space<vmem>>, vector<1x72x4xf32>
    %3 = vector.shape_cast %2 : vector<1x72x4xf32> to vector<72x4xf32>
    %cst = arith.constant dense<0.000000e+00> : vector<72x272xf32>
    %4 = tpu.matmul %3, %1, %cst {dimension_numbers = #tpu.dot_dimension_numbers<[1], [0], [0], [1], [0, 0, 1, 1], [], []>} : vector<72x4xf32>, vector<4x272xf32>, vector<72x272xf32> -> vector<72x272xf32>
    %c0_5 = arith.constant 0 : index
    %c0_6 = arith.constant 0 : index
    %c0_7 = arith.constant 0 : index
    %5 = vector.load %arg4[%c0_5, %c0_6, %c0_7] : memref<1x8x1xf32, #tpu.memory_space<vmem>>, vector<1x8x1xf32>
    %6 = vector.shape_cast %5 : vector<1x8x1xf32> to vector<8x1xf32>
    %7 = vector.extract_strided_slice %4 {offsets = [0, 0], sizes = [8, 272], strides = [1, 1]} : vector<72x272xf32> to vector<8x272xf32>
    %cst_8 = arith.constant 0.000000e+00 : f32
    %8 = vector.broadcast %cst_8 : f32 to vector<8x17xf32>
    %9 = tpu.concatenate %7, %8 in 1 : vector<8x272xf32>, vector<8x17xf32> -> vector<8x289xf32>
    %10 = vector.extract_strided_slice %4 {offsets = [16, 0], sizes = [8, 272], strides = [1, 1]} : vector<72x272xf32> to vector<8x272xf32>
    %cst_9 = arith.constant 0.000000e+00 : f32
    %11 = vector.broadcast %cst_9 : f32 to vector<8x1xf32>
    %cst_10 = arith.constant 0.000000e+00 : f32
    %12 = vector.broadcast %cst_10 : f32 to vector<8x16xf32>
    %13 = tpu.concatenate %11, %10, %12 in 1 : vector<8x1xf32>, vector<8x272xf32>, vector<8x16xf32> -> vector<8x289xf32>
    %14 = vector.extract_strided_slice %4 {offsets = [48, 0], sizes = [8, 272], strides = [1, 1]} : vector<72x272xf32> to vector<8x272xf32>
    %cst_11 = arith.constant 0.000000e+00 : f32
    %15 = vector.broadcast %cst_11 : f32 to vector<8x17xf32>
    %16 = tpu.concatenate %15, %14 in 1 : vector<8x17xf32>, vector<8x272xf32> -> vector<8x289xf32>
    %17 = vector.extract_strided_slice %4 {offsets = [64, 0], sizes = [8, 272], strides = [1, 1]} : vector<72x272xf32> to vector<8x272xf32>
    %cst_12 = arith.constant 0.000000e+00 : f32
    %18 = vector.broadcast %cst_12 : f32 to vector<8x18xf32>
    %19 = vector.extract_strided_slice %17 {offsets = [0, 0], sizes = [8, 271], strides = [1, 1]} : vector<8x272xf32> to vector<8x271xf32>
    %20 = tpu.concatenate %18, %19 in 1 : vector<8x18xf32>, vector<8x271xf32> -> vector<8x289xf32>
    %21 = arith.addf %9, %13 : vector<8x289xf32>
    %22 = arith.addf %21, %16 : vector<8x289xf32>
    %23 = arith.addf %22, %20 : vector<8x289xf32>
    %24 = vector.broadcast %6 : vector<8x1xf32> to vector<8x289xf32>
    %25 = arith.addf %23, %24 : vector<8x289xf32>
    %26 = vector.extract_strided_slice %4 {offsets = [8, 0], sizes = [8, 272], strides = [1, 1]} : vector<72x272xf32> to vector<8x272xf32>
    %cst_13 = arith.constant 0.000000e+00 : f32
    %27 = vector.broadcast %cst_13 : f32 to vector<8x17xf32>
    %28 = tpu.concatenate %26, %27 in 1 : vector<8x272xf32>, vector<8x17xf32> -> vector<8x289xf32>
    %29 = vector.extract_strided_slice %4 {offsets = [56, 0], sizes = [8, 272], strides = [1, 1]} : vector<72x272xf32> to vector<8x272xf32>
    %cst_14 = arith.constant 0.000000e+00 : f32
    %30 = vector.broadcast %cst_14 : f32 to vector<8x17xf32>
    %31 = tpu.concatenate %30, %29 in 1 : vector<8x17xf32>, vector<8x272xf32> -> vector<8x289xf32>
    %32 = arith.addf %28, %31 : vector<8x289xf32>
    %33 = vector.broadcast %6 : vector<8x1xf32> to vector<8x289xf32>
    %34 = arith.addf %32, %33 : vector<8x289xf32>
    %35 = vector.extract_strided_slice %4 {offsets = [24, 0], sizes = [8, 272], strides = [1, 1]} : vector<72x272xf32> to vector<8x272xf32>
    %cst_15 = arith.constant 0.000000e+00 : f32
    %36 = vector.broadcast %cst_15 : f32 to vector<8x17xf32>
    %37 = tpu.concatenate %35, %36 in 1 : vector<8x272xf32>, vector<8x17xf32> -> vector<8x289xf32>
    %38 = vector.extract_strided_slice %4 {offsets = [40, 0], sizes = [8, 272], strides = [1, 1]} : vector<72x272xf32> to vector<8x272xf32>
    %cst_16 = arith.constant 0.000000e+00 : f32
    %39 = vector.broadcast %cst_16 : f32 to vector<8x1xf32>
    %cst_17 = arith.constant 0.000000e+00 : f32
    %40 = vector.broadcast %cst_17 : f32 to vector<8x16xf32>
    %41 = tpu.concatenate %39, %38, %40 in 1 : vector<8x1xf32>, vector<8x272xf32>, vector<8x16xf32> -> vector<8x289xf32>
    %42 = arith.addf %37, %41 : vector<8x289xf32>
    %43 = vector.broadcast %6 : vector<8x1xf32> to vector<8x289xf32>
    %44 = arith.addf %42, %43 : vector<8x289xf32>
    %45 = vector.extract_strided_slice %4 {offsets = [32, 0], sizes = [8, 272], strides = [1, 1]} : vector<72x272xf32> to vector<8x272xf32>
    %cst_18 = arith.constant 0.000000e+00 : f32
    %46 = vector.broadcast %cst_18 : f32 to vector<8x17xf32>
    %47 = tpu.concatenate %45, %46 in 1 : vector<8x272xf32>, vector<8x17xf32> -> vector<8x289xf32>
    %48 = vector.broadcast %6 : vector<8x1xf32> to vector<8x289xf32>
    %49 = arith.addf %47, %48 : vector<8x289xf32>
    %50 = vector.extract_strided_slice %25 {offsets = [0, 0], sizes = [8, 272], strides = [1, 1]} : vector<8x289xf32> to vector<8x272xf32>
    %51 = vector.extract_strided_slice %44 {offsets = [0, 0], sizes = [8, 272], strides = [1, 1]} : vector<8x289xf32> to vector<8x272xf32>
    %52 = vector.extract_strided_slice %34 {offsets = [0, 0], sizes = [8, 272], strides = [1, 1]} : vector<8x289xf32> to vector<8x272xf32>
    %53 = vector.extract_strided_slice %49 {offsets = [0, 0], sizes = [8, 272], strides = [1, 1]} : vector<8x289xf32> to vector<8x272xf32>
    %54 = arith.addf %50, %51 : vector<8x272xf32>
    %55 = arith.addf %54, %52 : vector<8x272xf32>
    %56 = arith.addf %55, %53 : vector<8x272xf32>
    %cst_19 = arith.constant 2.500000e-01 : f32
    %57 = vector.broadcast %cst_19 : f32 to vector<8x272xf32>
    %58 = arith.mulf %57, %56 : vector<8x272xf32>
    %c0_20 = arith.constant 0 : index
    %c0_21 = arith.constant 0 : index
    %c0_22 = arith.constant 0 : index
    %c0_23 = arith.constant 0 : index
    %59 = vector.load %arg5[%c0_20, %c0_21, %c0_22, %c0_23] : memref<1x4x8x272xf32, #tpu.memory_space<vmem>>, vector<1x1x8x272xf32>
    %60 = vector.shape_cast %59 : vector<1x1x8x272xf32> to vector<8x272xf32>
    %61 = vector.shape_cast %58 : vector<8x272xf32> to vector<1x1x8x272xf32>
    tpu.vector_store %arg5[%c0_20, %c0_21, %c0_22, %c0_23], %61 {strides = array<i32>} : memref<1x4x8x272xf32, #tpu.memory_space<vmem>>, vector<1x1x8x272xf32>,
    %62 = vector.extract_strided_slice %34 {offsets = [0, 0], sizes = [8, 272], strides = [1, 1]} : vector<8x289xf32> to vector<8x272xf32>
    %63 = vector.extract_strided_slice %49 {offsets = [0, 0], sizes = [8, 272], strides = [1, 1]} : vector<8x289xf32> to vector<8x272xf32>
    %64 = vector.extract_strided_slice %25 {offsets = [0, 1], sizes = [8, 272], strides = [1, 1]} : vector<8x289xf32> to vector<8x272xf32>
    %65 = vector.extract_strided_slice %44 {offsets = [0, 1], sizes = [8, 272], strides = [1, 1]} : vector<8x289xf32> to vector<8x272xf32>
    %66 = arith.addf %62, %63 : vector<8x272xf32>
    %67 = arith.addf %66, %64 : vector<8x272xf32>
    %68 = arith.addf %67, %65 : vector<8x272xf32>
    %cst_24 = arith.constant 2.500000e-01 : f32
    %69 = vector.broadcast %cst_24 : f32 to vector<8x272xf32>
    %70 = arith.mulf %69, %68 : vector<8x272xf32>
    %c0_25 = arith.constant 0 : index
    %c1 = arith.constant 1 : index
    %c0_26 = arith.constant 0 : index
    %c0_27 = arith.constant 0 : index
    %71 = vector.load %arg5[%c0_25, %c1, %c0_26, %c0_27] : memref<1x4x8x272xf32, #tpu.memory_space<vmem>>, vector<1x1x8x272xf32>
    %72 = vector.shape_cast %71 : vector<1x1x8x272xf32> to vector<8x272xf32>
    %73 = vector.shape_cast %70 : vector<8x272xf32> to vector<1x1x8x272xf32>
    tpu.vector_store %arg5[%c0_25, %c1, %c0_26, %c0_27], %73 {strides = array<i32>} : memref<1x4x8x272xf32, #tpu.memory_space<vmem>>, vector<1x1x8x272xf32>,
    %74 = vector.extract_strided_slice %44 {offsets = [0, 0], sizes = [8, 272], strides = [1, 1]} : vector<8x289xf32> to vector<8x272xf32>
    %75 = vector.extract_strided_slice %25 {offsets = [0, 17], sizes = [8, 272], strides = [1, 1]} : vector<8x289xf32> to vector<8x272xf32>
    %76 = vector.extract_strided_slice %49 {offsets = [0, 0], sizes = [8, 272], strides = [1, 1]} : vector<8x289xf32> to vector<8x272xf32>
    %77 = vector.extract_strided_slice %34 {offsets = [0, 17], sizes = [8, 272], strides = [1, 1]} : vector<8x289xf32> to vector<8x272xf32>
    %78 = arith.addf %74, %75 : vector<8x272xf32>
    %79 = arith.addf %78, %76 : vector<8x272xf32>
    %80 = arith.addf %79, %77 : vector<8x272xf32>
    %cst_28 = arith.constant 2.500000e-01 : f32
    %81 = vector.broadcast %cst_28 : f32 to vector<8x272xf32>
    %82 = arith.mulf %81, %80 : vector<8x272xf32>
    %c0_29 = arith.constant 0 : index
    %c2 = arith.constant 2 : index
    %c0_30 = arith.constant 0 : index
    %c0_31 = arith.constant 0 : index
    %83 = vector.load %arg5[%c0_29, %c2, %c0_30, %c0_31] : memref<1x4x8x272xf32, #tpu.memory_space<vmem>>, vector<1x1x8x272xf32>
    %84 = vector.shape_cast %83 : vector<1x1x8x272xf32> to vector<8x272xf32>
    %85 = vector.shape_cast %82 : vector<8x272xf32> to vector<1x1x8x272xf32>
    tpu.vector_store %arg5[%c0_29, %c2, %c0_30, %c0_31], %85 {strides = array<i32>} : memref<1x4x8x272xf32, #tpu.memory_space<vmem>>, vector<1x1x8x272xf32>,
    %86 = vector.extract_strided_slice %49 {offsets = [0, 0], sizes = [8, 272], strides = [1, 1]} : vector<8x289xf32> to vector<8x272xf32>
    %87 = vector.extract_strided_slice %34 {offsets = [0, 17], sizes = [8, 272], strides = [1, 1]} : vector<8x289xf32> to vector<8x272xf32>
    %88 = vector.extract_strided_slice %44 {offsets = [0, 1], sizes = [8, 272], strides = [1, 1]} : vector<8x289xf32> to vector<8x272xf32>
    %89 = vector.extract_strided_slice %25 {offsets = [0, 18], sizes = [8, 271], strides = [1, 1]} : vector<8x289xf32> to vector<8x271xf32>
    %cst_32 = arith.constant 0.000000e+00 : f32
    %90 = vector.broadcast %cst_32 : f32 to vector<8x1xf32>
    %91 = tpu.concatenate %89, %90 in 1 : vector<8x271xf32>, vector<8x1xf32> -> vector<8x272xf32>
    %92 = arith.addf %86, %87 : vector<8x272xf32>
    %93 = arith.addf %92, %88 : vector<8x272xf32>
    %94 = arith.addf %93, %91 : vector<8x272xf32>
    %cst_33 = arith.constant 2.500000e-01 : f32
    %95 = vector.broadcast %cst_33 : f32 to vector<8x272xf32>
    %96 = arith.mulf %95, %94 : vector<8x272xf32>
    %c0_34 = arith.constant 0 : index
    %c3 = arith.constant 3 : index
    %c0_35 = arith.constant 0 : index
    %c0_36 = arith.constant 0 : index
    %97 = vector.load %arg5[%c0_34, %c3, %c0_35, %c0_36] : memref<1x4x8x272xf32, #tpu.memory_space<vmem>>, vector<1x1x8x272xf32>
    %98 = vector.shape_cast %97 : vector<1x1x8x272xf32> to vector<8x272xf32>
    %99 = vector.shape_cast %96 : vector<8x272xf32> to vector<1x1x8x272xf32>
    tpu.vector_store %arg5[%c0_34, %c3, %c0_35, %c0_36], %99 {strides = array<i32>} : memref<1x4x8x272xf32, #tpu.memory_space<vmem>>, vector<1x1x8x272xf32>,
    return
  }
  func.func @transform_0(%arg0: i32, %arg1: i32) -> (i32, i32, i32) {
    %c0_i32 = arith.constant 0 : i32
    %c0_i32_0 = arith.constant 0 : i32
    %c0_i32_1 = arith.constant 0 : i32
    return %arg0, %c0_i32, %c0_i32_0 : i32, i32, i32
  }
  func.func @transform_1(%arg0: i32, %arg1: i32) -> (i32, i32, i32) {
    %c0_i32 = arith.constant 0 : i32
    %c0_i32_0 = arith.constant 0 : i32
    %c0_i32_1 = arith.constant 0 : i32
    return %arg1, %c0_i32, %c0_i32_0 : i32, i32, i32
  }
  func.func @transform_2(%arg0: i32, %arg1: i32) -> (i32, i32, i32) {
    %c0_i32 = arith.constant 0 : i32
    %c0_i32_0 = arith.constant 0 : i32
    %c0_i32_1 = arith.constant 0 : i32
    return %arg1, %c0_i32, %c0_i32_0 : i32, i32, i32
  }
  func.func @transform_3(%arg0: i32, %arg1: i32) -> (i32, i32, i32, i32) {
    %c0_i32 = arith.constant 0 : i32
    %c0_i32_0 = arith.constant 0 : i32
    %c0_i32_1 = arith.constant 0 : i32
    return %arg0, %c0_i32, %arg1, %c0_i32_0 : i32, i32, i32, i32
  }
}

</mosaic_0001>

<llo_original>
// kernel: up_block_forward.1
$region0: #{up_block_forward.1}
  #allocation0 [shape = 'u32[]', space=smem, size = 0x4, offset = 0x4, fixed_abs, tag = 'smem constant byte address 0x4 - core index']
  #allocation1 [shape = 'u32[144,128]{1,0:T(1,128)}', space=vmem, size = 0x12000, scoped, tag = 'internal scratch']
  %s0 = inlined_call_operand.vmem [shape: f32[2,4,272], index: 0, kind: input, shape index: {}]
  %s1 = inlined_call_operand.vmem [shape: f32[1,72,4], index: 1, kind: input, shape index: {}]
  %s2 = inlined_call_operand.vmem [shape: f32[1,8,1], index: 2, kind: input, shape index: {}]
  %s3 = inlined_call_operand.vmem [shape: f32[2,4,8,272], index: 3, kind: output, shape index: {}]
  %s4 = sld [smem:[#allocation0]]
  $region45: #{up_block_forward.1} parent=0
    _
  %s6 = ssub.s32 1, %s4
  %s7 = scalar_select 0, %s6, %s4
  loop: start=0, step=1, limit=4
  $region2: #{up_block_forward.1} parent=0 // loop_pre_header
    _
  $region3: #{up_block_forward.1} parent=0 // loop_header
    %s9 = sphi 0, %s13
    %p10 = scmp.ge.s32.totalorder %s9, 4
    %s16 = sphi 0, %s28
    %s17 = sphi 0, %s24
    %s18 = sphi 0, %s16
    %s19 = sphi 0, %s17
    %s20 = sphi 0, %s18
    %s21 = sphi 0, %s19
    %s31 = sphi 0, %s33
    %s34 = sphi 0, %s31
    %s35 = sphi 0, %s34
    %s51 = sphi 0, %s35
    %s57 = sphi 0, %s59
    %s60 = sphi 0, %s57
    %s61 = sphi 0, %s60
    %s77 = sphi 0, %s61
    %s83 = sphi 0, %s85
    %s86 = sphi 0, %s83
    %s87 = sphi 0, %s86
    %s103 = sphi 0, %s87
    %s111 = sphi 0, %s113
    %s114 = sphi 0, %s111
    %s115 = sphi 0, %s114
    %s131 = sphi 0, %s115
  $region4: #{up_block_forward.1} parent=0 // loop_header_branch
    %12 = sbr.rel (%p10) target = $region8
  $region5: #{up_block_forward.1} parent=0 // loop_body
    %s14 = ssub.s32 %s9, 1
    %s15 = ssub.s32 %s9, 2
    %s22 = sadd.s32 1, %s17
    %p23 = scmp.ge.s32.totalorder %s22, 1
    %s24 = scalar_select %p23, 0, %s22
    %s25 = sadd.s32 1, %s16
    %s26 = scalar_select %p23, %s25, %s16
    %p27 = scmp.ge.s32.totalorder %s26, 2
    %s28 = scalar_select %p27, 0, %s26
    %s29 = ssub.s32 %s16, %s28
    %p30 = scmp.eq.s32.totalorder %s29, 0
    %s32 = sadd.s32 %s31, 1
    %s33 = scalar_select %p30, %s31, %s32
    %p36 = pneg %p30
    %p37 = scmp.eq.s32.totalorder %s9, 1
    %p38 = por %p36, %p37
    %p39 = scmp.ne.s32.totalorder %s31, %s34
    %p40 = scmp.eq.s32.totalorder %s9, 0
    %p41 = por %p39, %p40
    %p42 = scmp.ne.s32.totalorder %s31, %s34
    %p43 = scmp.eq.s32.totalorder %s14, 1
    %p44 = por %p42, %p43
    %p45 = scmp.ne.s32.totalorder %s34, %s35
    %p46 = scmp.eq.s32.totalorder %s14, 0
    %p47 = por %p45, %p46
    %p48 = scmp.ne.s32.totalorder %s34, %s35
    %p49 = scmp.eq.s32.totalorder %s15, 1
    %p50 = por %p48, %p49
    %p52 = scmp.ne.s32.totalorder %s35, %s51
    %p53 = scmp.eq.s32.totalorder %s15, 0
    %p54 = por %p52, %p53
    %s55 = ssub.s32 %s17, %s24
    %p56 = scmp.eq.s32.totalorder %s55, 0
    %s58 = sadd.s32 %s57, 1
    %s59 = scalar_select %p56, %s57, %s58
    %p62 = pneg %p56
    %p63 = scmp.eq.s32.totalorder %s9, 1
    %p64 = por %p62, %p63
    %p65 = scmp.ne.s32.totalorder %s57, %s60
    %p66 = scmp.eq.s32.totalorder %s9, 0
    %p67 = por %p65, %p66
    %p68 = scmp.ne.s32.totalorder %s57, %s60
    %p69 = scmp.eq.s32.totalorder %s14, 1
    %p70 = por %p68, %p69
    %p71 = scmp.ne.s32.totalorder %s60, %s61
    %p72 = scmp.eq.s32.totalorder %s14, 0
    %p73 = por %p71, %p72
    %p74 = scmp.ne.s32.totalorder %s60, %s61
    %p75 = scmp.eq.s32.totalorder %s15, 1
    %p76 = por %p74, %p75
    %p78 = scmp.ne.s32.totalorder %s61, %s77
    %p79 = scmp.eq.s32.totalorder %s15, 0
    %p80 = por %p78, %p79
    %s81 = ssub.s32 %s17, %s24
    %p82 = scmp.eq.s32.totalorder %s81, 0
    %s84 = sadd.s32 %s83, 1
    %s85 = scalar_select %p82, %s83, %s84
    %p88 = pneg %p82
    %p89 = scmp.eq.s32.totalorder %s9, 1
    %p90 = por %p88, %p89
    %p91 = scmp.ne.s32.totalorder %s83, %s86
    %p92 = scmp.eq.s32.totalorder %s9, 0
    %p93 = por %p91, %p92
    %p94 = scmp.ne.s32.totalorder %s83, %s86
    %p95 = scmp.eq.s32.totalorder %s14, 1
    %p96 = por %p94, %p95
    %p97 = scmp.ne.s32.totalorder %s86, %s87
    %p98 = scmp.eq.s32.totalorder %s14, 0
    %p99 = por %p97, %p98
    %p100 = scmp.ne.s32.totalorder %s86, %s87
    %p101 = scmp.eq.s32.totalorder %s15, 1
    %p102 = por %p100, %p101
    %p104 = scmp.ne.s32.totalorder %s87, %s103
    %p105 = scmp.eq.s32.totalorder %s15, 0
    %p106 = por %p104, %p105
    %s107 = ssub.s32 %s16, %s28
    %s108 = ssub.s32 %s17, %s24
    %s109 = sor.u32 %s107, %s108
    %p110 = scmp.eq.s32.totalorder %s109, 0
    %s112 = sadd.s32 %s111, 1
    %s113 = scalar_select %p110, %s111, %s112
    %p116 = pneg %p110
    %p117 = scmp.eq.s32.totalorder %s9, 1
    %p118 = por %p116, %p117
    %p119 = scmp.ne.s32.totalorder %s111, %s114
    %p120 = scmp.eq.s32.totalorder %s9, 0
    %p121 = por %p119, %p120
    %p122 = scmp.ne.s32.totalorder %s111, %s114
    %p123 = scmp.eq.s32.totalorder %s14, 1
    %p124 = por %p122, %p123
    %p125 = scmp.ne.s32.totalorder %s114, %s115
    %p126 = scmp.eq.s32.totalorder %s14, 0
    %p127 = por %p125, %p126
    %p128 = scmp.ne.s32.totalorder %s114, %s115
    %p129 = scmp.eq.s32.totalorder %s15, 1
    %p130 = por %p128, %p129
    %p132 = scmp.ne.s32.totalorder %s115, %s131
    %p133 = scmp.eq.s32.totalorder %s15, 0
    %p134 = por %p132, %p133
    %p135 = scmp.le.s32.totalorder 1, %s9
    %p136 = scmp.lt.s32.totalorder %s9, 3
    %p137 = pnand %p135, %p136
    %p138 = pneg %p137
    // Predicated region
    $region9: #{up_block_forward.1} parent=5 // pred_check
      _
    $region10: #{up_block_forward.1} parent=5 // pred_check_branch
      %140 = sbr.rel (%p137) target = $region12
    $region11: #{up_block_forward.1} parent=5 // pred_region
      %s141 = ssub.s32 %s9, 1
      // Predicated region
      $region13: #{up_block_forward.1} parent=11 // pred_check
        %p142 = pneg %p73
      $region14: #{up_block_forward.1} parent=11 // pred_check_branch
        %144 = sbr.rel (%p142) target = $region16
      $region15: #{up_block_forward.1} parent=11 // pred_region
        %p145 = scmp.lt.s32.totalorder %s19, 0
        %s146 = scalar_select %p145, %s19, 0
        %s147 = smul.addr %s146, 9
        %s148 = smul.addr %s147, 8
        %s149 = scalar_lea.vmem %s1, %s148
      $region16: #{up_block_forward.1} parent=11 // pred_fallthru
        _
      // Predicated region
      $region17: #{up_block_forward.1} parent=11 // pred_check
        %p150 = pneg %p99
      $region18: #{up_block_forward.1} parent=11 // pred_check_branch
        %152 = sbr.rel (%p150) target = $region20
      $region19: #{up_block_forward.1} parent=11 // pred_region
        %p153 = scmp.lt.s32.totalorder %s19, 0
        %s154 = scalar_select %p153, %s19, 0
        %s155 = smul.addr %s154, 8
        %s156 = scalar_lea.vmem %s2, %s155
      $region20: #{up_block_forward.1} parent=11 // pred_fallthru
        _
    $region12: #{up_block_forward.1} parent=5 // pred_fallthru
      _
    %p157 = scmp.lt.s32.totalorder %s9, 2
    // Predicated region
    $region21: #{up_block_forward.1} parent=5 // pred_check
      %p158 = pneg %p157
    $region22: #{up_block_forward.1} parent=5 // pred_check_branch
      %160 = sbr.rel (%p158) target = $region24
    $region23: #{up_block_forward.1} parent=5 // pred_region
      // Predicated region
      $region25: #{up_block_forward.1} parent=23 // pred_check
        %p161 = pneg %p41
      $region26: #{up_block_forward.1} parent=23 // pred_check_branch
        %163 = sbr.rel (%p161) target = $region28
      $region27: #{up_block_forward.1} parent=23 // pred_region
        %p164 = scmp.lt.s32.totalorder %s16, 1
        %s165 = scalar_select %p164, %s16, 1
        %s166 = smul.addr %s165, 3
        %s167 = smul.addr %s166, 4
        %s168 = scalar_lea.vmem %s0, %s167
      $region28: #{up_block_forward.1} parent=23 // pred_fallthru
        _
    $region24: #{up_block_forward.1} parent=5 // pred_fallthru
      _
    %p169 = scmp.le.s32.totalorder 1, %s9
    %p170 = scmp.lt.s32.totalorder %s9, 3
    %p171 = pnand %p169, %p170
    %p172 = pneg %p171
    // Predicated region
    $region29: #{up_block_forward.1} parent=5 // pred_check
      _
    $region30: #{up_block_forward.1} parent=5 // pred_check_branch
      %174 = sbr.rel (%p171) target = $region32
    $region31: #{up_block_forward.1} parent=5 // pred_region
      %s175 = ssub.s32 %s9, 1
      %p176 = scmp.lt.s32.totalorder %s18, 1
      %s177 = scalar_select %p176, %s18, 1
      %s178 = smul.addr %s177, 3
      %s179 = smul.addr %s178, 4
      %s180 = scalar_lea.vmem %s0, %s179
      %p181 = pneg %p47
      %p182 = pneg %p44
      %p183 = scmp.lt.s32.totalorder %s19, 0
      %s184 = scalar_select %p183, %s19, 0
      %s185 = smul.addr %s184, 9
      %s186 = smul.addr %s185, 8
      %s187 = scalar_lea.vmem %s1, %s186
      %p188 = pneg %p73
      %p189 = pneg %p70
      %p190 = scmp.lt.s32.totalorder %s19, 0
      %s191 = scalar_select %p190, %s19, 0
      %s192 = smul.addr %s191, 8
      %s193 = scalar_lea.vmem %s2, %s192
      %p194 = pneg %p99
      %p195 = pneg %p96
      %p196 = pneg %p127
      %p197 = pneg %p124
      %p198 = scmp.lt.s32.totalorder %s18, 1
      %s199 = scalar_select %p198, %s18, 1
      %p200 = scmp.lt.s32.totalorder %s19, 0
      %s201 = scalar_select %p200, %s19, 0
      %s202 = smul.addr %s201, 3
      %s203 = smul.addr %s199, 12
      %s204 = sadd.s32 %s202, %s203
      %s205 = smul.addr %s204, 8
      %s206 = scalar_lea.vmem %s3, %s205
      %p207 = scmp.lt.s32.totalorder %s18, 1
      %s208 = scalar_select %p207, %s18, 1
      %s209 = smul.addr %s208, 3
      %s210 = smul.addr %s209, 4
      %s211 = scalar_lea.vmem %s0, %s210
      %p212 = scmp.lt.s32.totalorder %s19, 0
      %s213 = scalar_select %p212, %s19, 0
      %s214 = smul.addr %s213, 9
      %s215 = smul.addr %s214, 8
      %s216 = scalar_lea.vmem %s1, %s215
      %p217 = scmp.lt.s32.totalorder %s19, 0
      %s218 = scalar_select %p217, %s19, 0
      %s219 = smul.addr %s218, 8
      %s220 = scalar_lea.vmem %s2, %s219
      %p221 = scmp.lt.s32.totalorder %s18, 1
      %s222 = scalar_select %p221, %s18, 1
      %p223 = scmp.lt.s32.totalorder %s19, 0
      %s224 = scalar_select %p223, %s19, 0
      %s225 = smul.addr %s224, 3
      %s226 = smul.addr %s222, 12
      %s227 = sadd.s32 %s225, %s226
      %s228 = smul.addr %s227, 8
      %s229 = scalar_lea.vmem %s3, %s228
      %v230 = vld [vmem:[%s211] sm:$0xff]
      %v231 = vld [vmem:[%s211 + $0x8] sm:$0xf]
      %v232 = vld [vmem:[%s216] sm:$0xff]
      %v233 = vld [vmem:[%s216 + $0x8] sm:$0xff]
      %v234 = vld [vmem:[%s216 + $0x10] sm:$0xff]
      %v235 = vld [vmem:[%s216 + $0x18] sm:$0xff]
      %v236 = vld [vmem:[%s216 + $0x20] sm:$0xff]
      %v237 = vld [vmem:[%s216 + $0x28] sm:$0xff]
      %v238 = vld [vmem:[%s216 + $0x30] sm:$0xff]
      %v239 = vld [vmem:[%s216 + $0x38] sm:$0xff]
      %v240 = vld [vmem:[%s216 + $0x40] sm:$0xff]
      %v243 = vcombine.high %v230, %v230
      %vm244 = vcmask 31744
      %v246 = vsel %vm244, %v232, 0
      %v249 = vsel %vm244, %v233, 0
      %v252 = vsel %vm244, %v234, 0
      %v255 = vsel %vm244, %v235, 0
      %v258 = vsel %vm244, %v236, 0
      %v261 = vsel %vm244, %v237, 0
      %v264 = vsel %vm244, %v238, 0
      %v267 = vsel %vm244, %v239, 0
      %v270 = vsel %vm244, %v240, 0
      %vm272 = vcmask 1043456
      %v273 = vsel %vm272, %v230, 0
      %v275 = vsel %vm272, %v243, 0
      %v277 = vsel %vm272, %v231, 0
      %279 = vmatprep.subr.mxu0 %v275
      %280 = vmatpush1.msra.mxu0 %v273
      %281 = vmatprep.subr.mxu0 0.0
      %282 = vmatpush1.msra.mxu0 0.0
      %283 = vmatprep.subr.mxu0 0.0
      %284 = vmatpush1.msra.mxu0 0.0
      %285 = vmatprep.subr.mxu0 0.0
      %286 = vmatpush1.msra.mxu0 0.0
      %287 = vmatprep.subr.mxu0 0.0
      %288 = vmatpush1.msra.mxu0 0.0
      %289 = vmatprep.subr.mxu0 0.0
      %290 = vmatpush1.msra.mxu0 0.0
      %291 = vmatprep.subr.mxu0 0.0
      %292 = vmatpush1.msra.mxu0 0.0
      %293 = vmatprep.subr.mxu0 0.0
      %294 = vmatpush1.msra.mxu0 0.0
      %295 = vmatprep.subr.mxu0 0.0
      %296 = vmatpush1.msra.mxu0 0.0
      %297 = vmatprep.subr.mxu0 0.0
      %298 = vmatpush1.msra.mxu0 0.0
      %299 = vmatprep.subr.mxu0 0.0
      %300 = vmatpush1.msra.mxu0 0.0
      %301 = vmatprep.subr.mxu0 0.0
      %302 = vmatpush1.msra.mxu0 0.0
      %303 = vmatprep.subr.mxu0 0.0
      %304 = vmatpush1.msra.mxu0 0.0
      %305 = vmatprep.subr.mxu0 0.0
      %306 = vmatpush1.msra.mxu0 0.0
      %307 = vmatprep.subr.mxu0 0.0
      %308 = vmatpush1.msra.mxu0 0.0
      %309 = vmatprep.subr.mxu0 0.0
      %310 = vmatpush1.msra.mxu0 0.0
      %311 = vmatprep.subr.mxu0 0.0
      %312 = vmatpush1.msra.mxu0 0.0
      %313 = vmatprep.subr.mxu0 0.0
      %314 = vmatpush1.msra.mxu0 0.0
      %315 = vmatprep.subr.mxu0 0.0
      %316 = vmatpush1.msra.mxu0 0.0
      %317 = vmatprep.subr.mxu0 0.0
      %318 = vmatpush1.msra.mxu0 0.0
      %319 = vmatprep.subr.mxu0 0.0
      %320 = vmatpush1.msra.mxu0 0.0
      %321 = vmatprep.subr.mxu0 0.0
      %322 = vmatpush1.msra.mxu0 0.0
      %323 = vmatprep.subr.mxu0 0.0
      %324 = vmatpush1.msra.mxu0 0.0
      %325 = vmatprep.subr.mxu0 0.0
      %326 = vmatpush1.msra.mxu0 0.0
      %327 = vmatprep.subr.mxu0 0.0
      %328 = vmatpush1.msra.mxu0 0.0
      %329 = vmatprep.subr.mxu0 0.0
      %330 = vmatpush1.msra.mxu0 0.0
      %331 = vmatprep.subr.mxu0 0.0
      %332 = vmatpush1.msra.mxu0 0.0
      %333 = vmatprep.subr.mxu0 0.0
      %334 = vmatpush1.msra.mxu0 0.0
      %335 = vmatprep.subr.mxu0 0.0
      %336 = vmatpush1.msra.mxu0 0.0
      %337 = vmatprep.subr.mxu0 0.0
      %338 = vmatpush1.msra.mxu0 0.0
      %339 = vmatprep.subr.mxu0 0.0
      %340 = vmatpush1.msra.mxu0 0.0
      %341 = vmatprep.subr.mxu0 0.0
      %342 = vmatpush1.msra.mxu0 0.0
      %343 = vmatprep.mubr.f32.mxu0 0.0
      %344 = vmatmul.mubr.f32.gmra.mrb[0].mxu0 %v246
      %v345 = vpop.f32.mrb[0].mxu0
      %v346 = vadd.f32 0.0, %v345
      %v347 = vpop.f32.mrb[0].mxu0
      %v348 = vadd.f32 0.0, %v347
      %349 = vmatprep.mubr.f32.mxu0 0.0
      %350 = vmatmul.mubr.f32.gmra.mrb[0].mxu0 %v249
      %v351 = vpop.f32.mrb[0].mxu0
      %v352 = vadd.f32 0.0, %v351
      %v353 = vpop.f32.mrb[0].mxu0
      %v354 = vadd.f32 0.0, %v353
      %355 = vmatprep.mubr.f32.mxu0 0.0
      %356 = vmatmul.mubr.f32.gmra.mrb[0].mxu0 %v252
      %v357 = vpop.f32.mrb[0].mxu0
      %v358 = vadd.f32 0.0, %v357
      %v359 = vpop.f32.mrb[0].mxu0
      %v360 = vadd.f32 0.0, %v359
      %361 = vmatprep.mubr.f32.mxu0 0.0
      %362 = vmatmul.mubr.f32.gmra.mrb[0].mxu0 %v255
      %v363 = vpop.f32.mrb[0].mxu0
      %v364 = vadd.f32 0.0, %v363
      %v365 = vpop.f32.mrb[0].mxu0
      %v366 = vadd.f32 0.0, %v365
      %367 = vmatprep.mubr.f32.mxu0 0.0
      %368 = vmatmul.mubr.f32.gmra.mrb[0].mxu0 %v258
      %v369 = vpop.f32.mrb[0].mxu0
      %v370 = vadd.f32 0.0, %v369
      %v371 = vpop.f32.mrb[0].mxu0
      %v372 = vadd.f32 0.0, %v371
      %373 = vmatprep.mubr.f32.mxu0 0.0
      %374 = vmatmul.mubr.f32.gmra.mrb[0].mxu0 %v261
      %v375 = vpop.f32.mrb[0].mxu0
      %v376 = vadd.f32 0.0, %v375
      %v377 = vpop.f32.mrb[0].mxu0
      %v378 = vadd.f32 0.0, %v377
      %379 = vmatprep.mubr.f32.mxu0 0.0
      %380 = vmatmul.mubr.f32.gmra.mrb[0].mxu0 %v264
      %v381 = vpop.f32.mrb[0].mxu0
      %v382 = vadd.f32 0.0, %v381
      %v383 = vpop.f32.mrb[0].mxu0
      %v384 = vadd.f32 0.0, %v383
      %385 = vmatprep.mubr.f32.mxu0 0.0
      %386 = vmatmul.mubr.f32.gmra.mrb[0].mxu0 %v267
      %v387 = vpop.f32.mrb[0].mxu0
      %v388 = vadd.f32 0.0, %v387
      %v389 = vpop.f32.mrb[0].mxu0
      %v390 = vadd.f32 0.0, %v389
      %391 = vmatprep.mubr.f32.mxu0 0.0
      %392 = vmatmul.mubr.f32.gmra.mrb[0].mxu0 %v270
      %v393 = vpop.f32.mrb[0].mxu0
      %v394 = vadd.f32 0.0, %v393
      %v395 = vpop.f32.mrb[0].mxu0
      %v396 = vadd.f32 0.0, %v395
      %397 = vdwg.mxu0
      %398 = vmatprep.subr.mxu0 0.0
      %399 = vmatpush1.msra.mxu0 %v277
      %400 = vmatprep.subr.mxu0 0.0
      %401 = vmatpush1.msra.mxu0 0.0
      %402 = vmatprep.subr.mxu0 0.0
      %403 = vmatpush1.msra.mxu0 0.0
      %404 = vmatprep.subr.mxu0 0.0
      %405 = vmatpush1.msra.mxu0 0.0
      %406 = vmatprep.subr.mxu0 0.0
      %407 = vmatpush1.msra.mxu0 0.0
      %408 = vmatprep.subr.mxu0 0.0
      %409 = vmatpush1.msra.mxu0 0.0
      %410 = vmatprep.subr.mxu0 0.0
      %411 = vmatpush1.msra.mxu0 0.0
      %412 = vmatprep.subr.mxu0 0.0
      %413 = vmatpush1.msra.mxu0 0.0
      %414 = vmatprep.subr.mxu0 0.0
      %415 = vmatpush1.msra.mxu0 0.0
      %416 = vmatprep.subr.mxu0 0.0
      %417 = vmatpush1.msra.mxu0 0.0
      %418 = vmatprep.subr.mxu0 0.0
      %419 = vmatpush1.msra.mxu0 0.0
      %420 = vmatprep.subr.mxu0 0.0
      %421 = vmatpush1.msra.mxu0 0.0
      %422 = vmatprep.subr.mxu0 0.0
      %423 = vmatpush1.msra.mxu0 0.0
      %424 = vmatprep.subr.mxu0 0.0
      %425 = vmatpush1.msra.mxu0 0.0
      %426 = vmatprep.subr.mxu0 0.0
      %427 = vmatpush1.msra.mxu0 0.0
      %428 = vmatprep.subr.mxu0 0.0
      %429 = vmatpush1.msra.mxu0 0.0
      %430 = vmatprep.subr.mxu0 0.0
      %431 = vmatpush1.msra.mxu0 0.0
      %432 = vmatprep.subr.mxu0 0.0
      %433 = vmatpush1.msra.mxu0 0.0
      %434 = vmatprep.subr.mxu0 0.0
      %435 = vmatpush1.msra.mxu0 0.0
      %436 = vmatprep.subr.mxu0 0.0
      %437 = vmatpush1.msra.mxu0 0.0
      %438 = vmatprep.subr.mxu0 0.0
      %439 = vmatpush1.msra.mxu0 0.0
      %440 = vmatprep.subr.mxu0 0.0
      %441 = vmatpush1.msra.mxu0 0.0
      %442 = vmatprep.subr.mxu0 0.0
      %443 = vmatpush1.msra.mxu0 0.0
      %444 = vmatprep.subr.mxu0 0.0
      %445 = vmatpush1.msra.mxu0 0.0
      %446 = vmatprep.subr.mxu0 0.0
      %447 = vmatpush1.msra.mxu0 0.0
      %448 = vmatprep.subr.mxu0 0.0
      %449 = vmatpush1.msra.mxu0 0.0
      %450 = vmatprep.subr.mxu0 0.0
      %451 = vmatpush1.msra.mxu0 0.0
      %452 = vmatprep.subr.mxu0 0.0
      %453 = vmatpush1.msra.mxu0 0.0
      %454 = vmatprep.subr.mxu0 0.0
      %455 = vmatpush1.msra.mxu0 0.0
      %456 = vmatprep.subr.mxu0 0.0
      %457 = vmatpush1.msra.mxu0 0.0
      %458 = vmatprep.subr.mxu0 0.0
      %459 = vmatpush1.msra.mxu0 0.0
      %460 = vmatprep.subr.mxu0 0.0
      %461 = vmatpush1.msra.mxu0 0.0
      %462 = vmatprep.mubr.f32.mxu0 0.0
      %463 = vmatmul.mubr.f32.gmra.mrb[0].mxu0 %v246
      %v464 = vpop.f32.mrb[0].mxu0
      %v465 = vadd.f32 0.0, %v464
      %v466 = vpop.f32.mrb[0].mxu0
      %467 = vmatprep.mubr.f32.mxu0 0.0
      %468 = vmatmul.mubr.f32.gmra.mrb[0].mxu0 %v249
      %v469 = vpop.f32.mrb[0].mxu0
      %v470 = vadd.f32 0.0, %v469
      %v471 = vpop.f32.mrb[0].mxu0
      %472 = vmatprep.mubr.f32.mxu0 0.0
      %473 = vmatmul.mubr.f32.gmra.mrb[0].mxu0 %v252
      %v474 = vpop.f32.mrb[0].mxu0
      %v475 = vadd.f32 0.0, %v474
      %v476 = vpop.f32.mrb[0].mxu0
      %477 = vmatprep.mubr.f32.mxu0 0.0
      %478 = vmatmul.mubr.f32.gmra.mrb[0].mxu0 %v255
      %v479 = vpop.f32.mrb[0].mxu0
      %v480 = vadd.f32 0.0, %v479
      %v481 = vpop.f32.mrb[0].mxu0
      %482 = vmatprep.mubr.f32.mxu0 0.0
      %483 = vmatmul.mubr.f32.gmra.mrb[0].mxu0 %v258
      %v484 = vpop.f32.mrb[0].mxu0
      %v485 = vadd.f32 0.0, %v484
      %v486 = vpop.f32.mrb[0].mxu0
      %487 = vmatprep.mubr.f32.mxu0 0.0
      %488 = vmatmul.mubr.f32.gmra.mrb[0].mxu0 %v261
      %v489 = vpop.f32.mrb[0].mxu0
      %v490 = vadd.f32 0.0, %v489
      %v491 = vpop.f32.mrb[0].mxu0
      %492 = vmatprep.mubr.f32.mxu0 0.0
      %493 = vmatmul.mubr.f32.gmra.mrb[0].mxu0 %v264
      %v494 = vpop.f32.mrb[0].mxu0
      %v495 = vadd.f32 0.0, %v494
      %v496 = vpop.f32.mrb[0].mxu0
      %497 = vmatprep.mubr.f32.mxu0 0.0
      %498 = vmatmul.mubr.f32.gmra.mrb[0].mxu0 %v267
      %v499 = vpop.f32.mrb[0].mxu0
      %v500 = vadd.f32 0.0, %v499
      %v501 = vpop.f32.mrb[0].mxu0
      %502 = vmatprep.mubr.f32.mxu0 0.0
      %503 = vmatmul.mubr.f32.gmra.mrb[0].mxu0 %v270
      %v504 = vpop.f32.mrb[0].mxu0
      %v505 = vadd.f32 0.0, %v504
      %v506 = vpop.f32.mrb[0].mxu0
      %507 = vdwg.mxu0
      %v508 = vld [vmem:[%s220] sm:$0xff]
      %vm509 = vcmask 130048
      %v510 = vsel %vm509, %v465, 0.0
      %514 = vrot.lane.b32.xlu0 %v358, 1
      %v515 = vpop.permute.xlu0 %514
      %516 = vrot.lane.b32.xlu0 %v360, 1
      %v517 = vpop.permute.xlu0 %516
      %518 = vrot.lane.b32.xlu0 %v475, 1
      %v519 = vpop.permute.xlu0 %518
      %vm520 = vcmask 7168
      %v521 = vsel %vm520, %v515, %v517
      %v522 = vsel %vm520, %v517, %v519
      %v526 = vsel %vm520, 0.0, %v515
      %vm527 = vcmask 138240
      %v528 = vsel %vm527, %v522, 0.0
      %532 = vrot.lane.b32.xlu0 %v382, 17
      %v533 = vpop.permute.xlu0 %532
      %534 = vrot.lane.b32.xlu0 %v384, 17
      %v535 = vpop.permute.xlu0 %534
      %536 = vrot.lane.b32.xlu0 %v495, 17
      %v537 = vpop.permute.xlu0 %536
      %v538 = vsel %vm527, %v533, %v535
      %v539 = vsel %vm527, %v535, %v537
      %v543 = vsel %vm527, 0.0, %v533
      %547 = vrot.lane.b32.xlu0 %v394, 18
      %v548 = vpop.permute.xlu0 %547
      %549 = vrot.lane.b32.xlu0 %v396, 18
      %v550 = vpop.permute.xlu0 %549
      %551 = vrot.lane.b32.xlu0 %v505, 18
      %v552 = vpop.permute.xlu0 %551
      %vm553 = vcmask 146432
      %v554 = vsel %vm553, %v548, %v550
      %v555 = vsel %vm553, %v550, %v552
      %v559 = vsel %vm553, 0.0, %v548
      %v560 = vadd.f32 %v346, %v526
      %v561 = vadd.f32 %v348, %v521
      %v562 = vadd.f32 %v510, %v528
      %v563 = vadd.f32 %v560, %v543
      %v564 = vadd.f32 %v561, %v538
      %v565 = vadd.f32 %v562, %v539
      %v566 = vadd.f32 %v563, %v559
      %v567 = vadd.f32 %v564, %v554
      %v568 = vadd.f32 %v565, %v555
      %570 = vset.pattern.permute.xlu0 0
      %571 = vperm.xlu0 %570, %v508
      %v572 = vpop.permute.xlu0 %571
      %v574 = vadd.f32 %v566, %v572
      %v575 = vadd.f32 %v567, %v572
      %v576 = vadd.f32 %v568, %v572
      %v577 = vsel %vm509, %v470, 0.0
      %581 = vrot.lane.b32.xlu0 %v388, 17
      %v582 = vpop.permute.xlu0 %581
      %583 = vrot.lane.b32.xlu0 %v390, 17
      %v584 = vpop.permute.xlu0 %583
      %585 = vrot.lane.b32.xlu0 %v500, 17
      %v586 = vpop.permute.xlu0 %585
      %v587 = vsel %vm527, %v582, %v584
      %v588 = vsel %vm527, %v584, %v586
      %v592 = vsel %vm527, 0.0, %v582
      %v593 = vadd.f32 %v352, %v592
      %v594 = vadd.f32 %v354, %v587
      %v595 = vadd.f32 %v577, %v588
      %v596 = vadd.f32 %v593, %v572
      %v597 = vadd.f32 %v594, %v572
      %v598 = vadd.f32 %v595, %v572
      %v599 = vsel %vm509, %v480, 0.0
      %603 = vrot.lane.b32.xlu0 %v376, 1
      %v604 = vpop.permute.xlu0 %603
      %605 = vrot.lane.b32.xlu0 %v378, 1
      %v606 = vpop.permute.xlu0 %605
      %607 = vrot.lane.b32.xlu0 %v490, 1
      %v608 = vpop.permute.xlu0 %607
      %v609 = vsel %vm520, %v604, %v606
      %v610 = vsel %vm520, %v606, %v608
      %v614 = vsel %vm520, 0.0, %v604
      %v615 = vsel %vm527, %v610, 0.0
      %v616 = vadd.f32 %v364, %v614
      %v617 = vadd.f32 %v366, %v609
      %v618 = vadd.f32 %v599, %v615
      %v619 = vadd.f32 %v616, %v572
      %v620 = vadd.f32 %v617, %v572
      %v621 = vadd.f32 %v618, %v572
      %v622 = vsel %vm509, %v485, 0.0
      %v623 = vadd.f32 %v370, %v572
      %v624 = vadd.f32 %v372, %v572
      %v625 = vadd.f32 %v622, %v572
      %v626 = vadd.f32 %v574, %v619
      %v627 = vadd.f32 %v575, %v620
      %v628 = vadd.f32 %v576, %v621
      %v629 = vadd.f32 %v626, %v596
      %v630 = vadd.f32 %v627, %v597
      %v631 = vadd.f32 %v628, %v598
      %v632 = vadd.f32 %v629, %v623
      %v633 = vadd.f32 %v630, %v624
      %v634 = vadd.f32 %v631, %v625
      %v635 = vmul.f32 %v632, 0.25
      %v636 = vmul.f32 %v633, 0.25
      %v637 = vmul.f32 %v634, 0.25
      %638 = vst [vmem:[%s229] sm:$0xff] %v635
      %639 = vst [vmem:[%s229 + $0x8] sm:$0xff] %v636
      %640 = vst.msk [vmem:[%s229 + $0x10] sm:$0xff] %vm509, %v637
      %v641 = vadd.f32 %v596, %v623
      %v642 = vadd.f32 %v597, %v624
      %v643 = vadd.f32 %v598, %v625
      %647 = vrot.lane.b32.xlu0 %v574, 127
      %v648 = vpop.permute.xlu0 %647
      %649 = vrot.lane.b32.xlu0 %v575, 127
      %v650 = vpop.permute.xlu0 %649
      %651 = vrot.lane.b32.xlu0 %v576, 127
      %v652 = vpop.permute.xlu0 %651
      %vm653 = vcmask 1039360
      %v654 = vsel %vm653, %v648, %v650
      %v655 = vsel %vm653, %v650, %v652
      %v659 = vadd.f32 %v641, %v654
      %v660 = vadd.f32 %v642, %v655
      %v661 = vadd.f32 %v643, %v652
      %665 = vrot.lane.b32.xlu0 %v619, 127
      %v666 = vpop.permute.xlu0 %665
      %667 = vrot.lane.b32.xlu0 %v620, 127
      %v668 = vpop.permute.xlu0 %667
      %669 = vrot.lane.b32.xlu0 %v621, 127
      %v670 = vpop.permute.xlu0 %669
      %v671 = vsel %vm653, %v666, %v668
      %v672 = vsel %vm653, %v668, %v670
      %v676 = vadd.f32 %v659, %v671
      %v677 = vadd.f32 %v660, %v672
      %v678 = vadd.f32 %v661, %v670
      %v679 = vmul.f32 %v676, 0.25
      %v680 = vmul.f32 %v677, 0.25
      %v681 = vmul.f32 %v678, 0.25
      %s682 = scalar_lea.vmem %s229, 24
      %683 = vst [vmem:[%s682] sm:$0xff] %v679
      %684 = vst [vmem:[%s682 + $0x8] sm:$0xff] %v680
      %685 = vst.msk [vmem:[%s682 + $0x10] sm:$0xff] %vm509, %v681
      %686 = vrot.lane.b32.xlu0 %v574, 111
      %v687 = vpop.permute.xlu0 %686
      %688 = vrot.lane.b32.xlu0 %v575, 111
      %v689 = vpop.permute.xlu0 %688
      %690 = vrot.lane.b32.xlu0 %v576, 111
      %v691 = vpop.permute.xlu0 %690
      %vm692 = vcmask 908288
      %v693 = vsel %vm692, %v687, %v689
      %v694 = vsel %vm692, %v689, %v691
      %v698 = vadd.f32 %v619, %v693
      %v699 = vadd.f32 %v620, %v694
      %v700 = vadd.f32 %v621, %v691
      %v701 = vadd.f32 %v698, %v623
      %v702 = vadd.f32 %v699, %v624
      %v703 = vadd.f32 %v700, %v625
      %707 = vrot.lane.b32.xlu0 %v596, 111
      %v708 = vpop.permute.xlu0 %707
      %709 = vrot.lane.b32.xlu0 %v597, 111
      %v710 = vpop.permute.xlu0 %709
      %711 = vrot.lane.b32.xlu0 %v598, 111
      %v712 = vpop.permute.xlu0 %711
      %v713 = vsel %vm692, %v708, %v710
      %v714 = vsel %vm692, %v710, %v712
      %v718 = vadd.f32 %v701, %v713
      %v719 = vadd.f32 %v702, %v714
      %v720 = vadd.f32 %v703, %v712
      %v721 = vmul.f32 %v718, 0.25
      %v722 = vmul.f32 %v719, 0.25
      %v723 = vmul.f32 %v720, 0.25
      %s724 = scalar_lea.vmem %s229, 48
      %725 = vst [vmem:[%s724] sm:$0xff] %v721
      %726 = vst [vmem:[%s724 + $0x8] sm:$0xff] %v722
      %727 = vst.msk [vmem:[%s724 + $0x10] sm:$0xff] %vm509, %v723
      %728 = vrot.lane.b32.xlu0 %v574, 110
      %v729 = vpop.permute.xlu0 %728
      %730 = vrot.lane.b32.xlu0 %v575, 110
      %v731 = vpop.permute.xlu0 %730
      %732 = vrot.lane.b32.xlu0 %v576, 110
      %v733 = vpop.permute.xlu0 %732
      %vm734 = vcmask 900096
      %v735 = vsel %vm734, %v729, %v731
      %v736 = vsel %vm734, %v731, %v733
      %vm740 = vcmask 121856
      %v741 = vsel %vm740, %v733, 0.0
      %v742 = vadd.f32 %v623, %v713
      %v743 = vadd.f32 %v624, %v714
      %v744 = vadd.f32 %v625, %v712
      %v745 = vadd.f32 %v742, %v671
      %v746 = vadd.f32 %v743, %v672
      %v747 = vadd.f32 %v744, %v670
      %v748 = vadd.f32 %v745, %v735
      %v749 = vadd.f32 %v746, %v736
      %v750 = vadd.f32 %v747, %v741
      %v751 = vmul.f32 %v748, 0.25
      %v752 = vmul.f32 %v749, 0.25
      %v753 = vmul.f32 %v750, 0.25
      %s754 = scalar_lea.vmem %s229, 72
      %755 = vst [vmem:[%s754] sm:$0xff] %v751
      %756 = vst [vmem:[%s754 + $0x8] sm:$0xff] %v752
      %757 = vst.msk [vmem:[%s754 + $0x10] sm:$0xff] %vm509, %v753
      %p758 = scmp.lt.s32.totalorder %s18, 1
      %s759 = scalar_select %p758, %s18, 1
      %p760 = scmp.lt.s32.totalorder %s19, 0
      %s761 = scalar_select %p760, %s19, 0
      %s762 = smul.addr %s761, 3
      %s763 = smul.addr %s759, 12
      %s764 = sadd.s32 %s762, %s763
      %s765 = smul.addr %s764, 8
      %s766 = scalar_lea.vmem %s3, %s765
      // Predicated region
      $region33: #{up_block_forward.1} parent=31 // pred_check
        %p767 = pneg %p124
      $region34: #{up_block_forward.1} parent=31 // pred_check_branch
        %769 = sbr.rel (%p767) target = $region36
      $region35: #{up_block_forward.1} parent=31 // pred_region
        _
      $region36: #{up_block_forward.1} parent=31 // pred_fallthru
        _
    $region32: #{up_block_forward.1} parent=5 // pred_fallthru
      _
    %p770 = scmp.le.s32.totalorder 2, %s9
    // Predicated region
    $region37: #{up_block_forward.1} parent=5 // pred_check
      %p771 = pneg %p770
    $region38: #{up_block_forward.1} parent=5 // pred_check_branch
      %773 = sbr.rel (%p771) target = $region40
    $region39: #{up_block_forward.1} parent=5 // pred_region
      %s774 = ssub.s32 %s9, 2
      // Predicated region
      $region41: #{up_block_forward.1} parent=39 // pred_check
        %p775 = pneg %p130
      $region42: #{up_block_forward.1} parent=39 // pred_check_branch
        %777 = sbr.rel (%p775) target = $region44
      $region43: #{up_block_forward.1} parent=39 // pred_region
        %p778 = scmp.lt.s32.totalorder %s20, 1
        %s779 = scalar_select %p778, %s20, 1
        %p780 = scmp.lt.s32.totalorder %s21, 0
        %s781 = scalar_select %p780, %s21, 0
        %s782 = smul.addr %s781, 3
        %s783 = smul.addr %s779, 12
        %s784 = sadd.s32 %s782, %s783
        %s785 = smul.addr %s784, 8
        %s786 = scalar_lea.vmem %s3, %s785
      $region44: #{up_block_forward.1} parent=39 // pred_fallthru
        _
    $region40: #{up_block_forward.1} parent=5 // pred_fallthru
      _
  $region6: #{up_block_forward.1} parent=0 // loop_footer
    %s13 = sadd.s32 1, %s9
  $region7: #{up_block_forward.1} parent=0 // loop_footer_branch
    %8 = sbr.rel target = $region3
  $region8: #{up_block_forward.1} parent=0 // loop_exit
    _

</llo_original>
